<compile_context>
chip_gen: v6e
topology: v6e:2x2x1
jax: 0.10.0
libtpu: 0.0.40
codegen_flags: <defaults>
</compile_context>

<pallas_src>
import jax
import jax.numpy as jnp
from jax.experimental import pallas as pl
from jax.experimental.pallas import tpu as pltpu

HIDDEN = 256
OUT_PAD = 128  # lane-dense padded output width (q1 -> lane 0, q2 -> lane 1)


def _dual_critic_kernel(
    s_ref, a_ref,
    w1s_ref, w1a_ref, b1_ref,
    w21_ref, b21_ref, w22_ref, b22_ref,
    w31_ref, w32_ref, b3p_ref,
    o_ref,
):
    """Fused dual MLP: stacked L1 (MXU) -> per-net L2 (MXU) -> VPU row-reduce head."""
    # Inputs may arrive f32 or bf16; cast in-kernel (no-op if already bf16).
    s = s_ref[...].astype(jnp.bfloat16)
    a = a_ref[...].astype(jnp.bfloat16)

    # Layer 1 for BOTH nets in one pair of dots: W1 stacked to (*, 2H).
    h1 = (
        jnp.dot(s, w1s_ref[...], preferred_element_type=jnp.float32)
        + jnp.dot(a, w1a_ref[...], preferred_element_type=jnp.float32)
        + b1_ref[...]
    )
    h1 = jnp.maximum(h1, 0.0).astype(jnp.bfloat16)
    h1_1 = h1[:, :HIDDEN]   # 128-aligned lane split -> layout clean
    h1_2 = h1[:, HIDDEN:]

    def head(h1n, w2_ref, b2_ref, w3_ref):
        h2 = jnp.dot(h1n, w2_ref[...], preferred_element_type=jnp.float32) + b2_ref[...]
        h2 = jnp.maximum(h2, 0.0)
        # Output layer as VPU multiply + XLU lane reduction, f32 operands
        # (replaces the mostly-zero padded MXU dot; keeps q precision).
        return jnp.sum(h2 * w3_ref[...], axis=-1, keepdims=True)  # (tb, 1) f32

    q1 = head(h1_1, w21_ref, b21_ref, w31_ref)
    q2 = head(h1_2, w22_ref, b22_ref, w32_ref)

    # Splice q1/q2 into lanes 0/1 of a lane-dense (tb, 128) slab (unmasked vst).
    lane = jax.lax.broadcasted_iota(jnp.int32, o_ref.shape, 1)
    out = jnp.where(lane == 0, q1, jnp.where(lane == 1, q2, 0.0)) + b3p_ref[...]
    o_ref[...] = out


_WEIGHT_KEYS = (
    "w1s", "w1a", "b1",
    "n1_w2", "n1_b2", "n2_w2", "n2_b2",
    "n1_w3", "n2_w3", "b3p",
)


def _round_up(x, m):
    return -(-x // m) * m


def _pick_batch_tile(batch):
    # Small batches: single full block (block dim may equal the full array dim).
    if batch <= 64:
        return batch
    # Otherwise ensure >= 2 grid blocks so both v7x TensorCores get work,
    # capped at 1024 rows per tile (fewer grid steps on v5e/v6e; VMEM is
    # nowhere near the limit on any generation).
    half = _round_up(pl.cdiv(batch, 2), 8)
    return min(1024, half)


@jax.jit
def sac_critic_forward(params, states, actions):
    B, S = states.shape
    A = actions.shape[1]
    H = params["n1_w2"].shape[0]

    tb = _pick_batch_tile(B)
    grid = (pl.cdiv(B, tb),)

    def row_spec(feat):
        return pl.BlockSpec((tb, feat), lambda i: (i, 0))

    def resident_spec(arr):
        # Same block index every grid step -> weight stays resident in VMEM.
        return pl.BlockSpec(arr.shape, lambda i: (0,) * arr.ndim)

    weights = [params[k] for k in _WEIGHT_KEYS]

    flops = 2 * B * 2 * ((S + A) * H + H * H + H)
    bytes_accessed = (
        states.size * states.dtype.itemsize
        + actions.size * actions.dtype.itemsize
        + sum(int(w.size) * w.dtype.itemsize for w in weights)
        + B * OUT_PAD * 4
    )

    out = pl.pallas_call(
        _dual_critic_kernel,
        out_shape=jax.ShapeDtypeStruct((B, OUT_PAD), jnp.float32),
        grid=grid,
        in_specs=[row_spec(S), row_spec(A)] + [resident_spec(w) for w in weights],
        out_specs=row_spec(OUT_PAD),
        compiler_params=pltpu.CompilerParams(
            dimension_semantics=("parallel",),
        ),
        cost_estimate=pl.CostEstimate(
            flops=flops, transcendentals=0, bytes_accessed=bytes_accessed
        ),
    )(states, actions, *weights)

    # Single slab read, then split (q1, q2).
    q = out[:, :2]
    return q[:, 0:1], q[:, 1:2]


def _init_linear(key, fan_in, fan_out):
    """Deterministic init mimicking nn.Linear defaults (uniform +/- 1/sqrt(fan_in))."""
    kw, kb = jax.random.split(key)
    bound = 1.0 / jnp.sqrt(jnp.float32(fan_in))
    w = jax.random.uniform(kw, (fan_in, fan_out), jnp.float32, -bound, bound)
    b = jax.random.uniform(kb, (1, fan_out), jnp.float32, -bound, bound)
    return w, b


def init_sac_critic_params(key, state_dim, action_dim, hidden=HIDDEN, out_pad=OUT_PAD):
    """Kernel-packed params: stacked bf16 W1 (both nets), bf16 W2, f32 W3 rows, padded b3."""
    in_dim = state_dim + action_dim
    keys = jax.random.split(key, 6)
    params = {}
    w1_cols, b1_cols = [], []
    b3p = jnp.zeros((1, out_pad), jnp.float32)
    for net_idx, col in ((0, 0), (1, 1)):
        k0, k1, k2 = keys[3 * net_idx: 3 * net_idx + 3]
        w1, b1 = _init_linear(k0, in_dim, hidden)
        w2, b2 = _init_linear(k1, hidden, hidden)
        w3, b3 = _init_linear(k2, hidden, 1)
        w1_cols.append(w1)
        b1_cols.append(b1)
        p = f"n{net_idx + 1}_"
        params[p + "w2"] = w2.astype(jnp.bfloat16)
        params[p + "b2"] = b2
        params[p + "w3"] = w3.T  # (1, hidden) f32 row for the VPU reduction head
        b3p = b3p.at[0, col].set(b3[0, 0])
    w1_both = jnp.concatenate(w1_cols, axis=1)           # (in_dim, 2H)
    params["w1s"] = w1_both[:state_dim].astype(jnp.bfloat16)
    params["w1a"] = w1_both[state_dim:].astype(jnp.bfloat16)
    params["b1"] = jnp.concatenate(b1_cols, axis=1)      # (1, 2H) f32
    params["b3p"] = b3p
    return params


def _reference_forward(params, states, actions):
    """Pure-JAX f32 reference using the same (bf16-quantized) packed weights."""
    H = params["n1_w2"].shape[0]
    x = jnp.concatenate([states, actions], axis=-1)
    w1 = jnp.concatenate([params["w1s"], params["w1a"]], axis=0).astype(jnp.float32)
    h1 = jnp.maximum(x @ w1 + params["b1"], 0.0)

    def head(h1n, prefix, col):
        h2 = jnp.maximum(
            h1n @ params[prefix + "w2"].astype(jnp.float32) + params[prefix + "b2"], 0.0
        )
        return h2 @ params[prefix + "w3"].T + params["b3p"][:, col: col + 1]

    return head(h1[:, :H], "n1_", 0), head(h1[:, H:], "n2_", 1)


if __name__ == "__main__":
    key = jax.random.PRNGKey(0)
    k_params, k_states, k_actions = jax.random.split(key, 3)

    B, STATE_DIM, ACTION_DIM = 2, 8, 4
    params = init_sac_critic_params(k_params, STATE_DIM, ACTION_DIM)

    states = jax.random.normal(k_states, (B, STATE_DIM), jnp.float32)
    actions = jax.random.normal(k_actions, (B, ACTION_DIM), jnp.float32)

    q1, q2 = sac_critic_forward(params, states, actions)
    jax.block_until_ready((q1, q2))

    # Correctness vs pure-JAX reference (looser tolerance: bf16 matmul operands,
    # f32 accumulation).
    r1, r2 = _reference_forward(params, states, actions)
    assert q1.shape == (B, 1) and q2.shape == (B, 1)
    assert jnp.allclose(q1, r1, atol=2e-2, rtol=2e-2), "net1 mismatch"
    assert jnp.allclose(q2, r2, atol=2e-2, rtol=2e-2), "net2 mismatch"

    print("KERNEL_OK")
</pallas_src>

<mosaic_0001>
module attributes {stable_mosaic.version = 11 : i64} {
  func.func @_dual_critic_kernel(%arg0: i32, %arg1: memref<2x8xf32, #tpu.memory_space<vmem>>, %arg2: memref<2x4xf32, #tpu.memory_space<vmem>>, %arg3: memref<8x512xbf16, #tpu.memory_space<vmem>>, %arg4: memref<4x512xbf16, #tpu.memory_space<vmem>>, %arg5: memref<1x512xf32, #tpu.memory_space<vmem>>, %arg6: memref<256x256xbf16, #tpu.memory_space<vmem>>, %arg7: memref<1x256xf32, #tpu.memory_space<vmem>>, %arg8: memref<256x256xbf16, #tpu.memory_space<vmem>>, %arg9: memref<1x256xf32, #tpu.memory_space<vmem>>, %arg10: memref<1x256xf32, #tpu.memory_space<vmem>>, %arg11: memref<1x256xf32, #tpu.memory_space<vmem>>, %arg12: memref<1x128xf32, #tpu.memory_space<vmem>>, %arg13: memref<2x128xf32, #tpu.memory_space<vmem>>) attributes {dimension_semantics = [#tpu.dimension_semantics<parallel>], iteration_bounds = array<i64: 1>, scalar_prefetch = 0 : i64, scratch_operands = 0 : i64, tpu.core_type = #tpu.core_type<tc>, window_params = [{transform_indices = @transform_0, window_bounds = array<i64: 2, 8>}, {transform_indices = @transform_1, window_bounds = array<i64: 2, 4>}, {pipeline_mode = #tpu.pipeline_mode<synchronous>, transform_indices = @transform_2, window_bounds = array<i64: 8, 512>}, {pipeline_mode = #tpu.pipeline_mode<synchronous>, transform_indices = @transform_3, window_bounds = array<i64: 4, 512>}, {pipeline_mode = #tpu.pipeline_mode<synchronous>, transform_indices = @transform_4, window_bounds = array<i64: 1, 512>}, {pipeline_mode = #tpu.pipeline_mode<synchronous>, transform_indices = @transform_5, window_bounds = array<i64: 256, 256>}, {pipeline_mode = #tpu.pipeline_mode<synchronous>, transform_indices = @transform_6, window_bounds = array<i64: 1, 256>}, {pipeline_mode = #tpu.pipeline_mode<synchronous>, transform_indices = @transform_7, window_bounds = array<i64: 256, 256>}, {pipeline_mode = #tpu.pipeline_mode<synchronous>, transform_indices = @transform_8, window_bounds = array<i64: 1, 256>}, {pipeline_mode = #tpu.pipeline_mode<synchronous>, transform_indices = @transform_9, window_bounds = array<i64: 1, 256>}, {pipeline_mode = #tpu.pipeline_mode<synchronous>, transform_indices = @transform_10, window_bounds = array<i64: 1, 256>}, {pipeline_mode = #tpu.pipeline_mode<synchronous>, transform_indices = @transform_11, window_bounds = array<i64: 1, 128>}, {transform_indices = @transform_12, window_bounds = array<i64: 2, 128>}]} {
    %c0 = arith.constant 0 : index
    %c0_0 = arith.constant 0 : index
    %0 = vector.load %arg1[%c0, %c0_0] : memref<2x8xf32, #tpu.memory_space<vmem>>, vector<2x8xf32>
    %1 = arith.truncf %0 : vector<2x8xf32> to vector<2x8xbf16>
    %c0_1 = arith.constant 0 : index
    %c0_2 = arith.constant 0 : index
    %2 = vector.load %arg2[%c0_1, %c0_2] : memref<2x4xf32, #tpu.memory_space<vmem>>, vector<2x4xf32>
    %3 = arith.truncf %2 : vector<2x4xf32> to vector<2x4xbf16>
    %c0_3 = arith.constant 0 : index
    %c0_4 = arith.constant 0 : index
    %4 = vector.load %arg3[%c0_3, %c0_4] : memref<8x512xbf16, #tpu.memory_space<vmem>>, vector<8x512xbf16>
    %cst = arith.constant dense<0.000000e+00> : vector<2x512xf32>
    %5 = tpu.matmul %1, %4, %cst {dimension_numbers = #tpu.dot_dimension_numbers<[1], [0], [0], [1], [0, 0, 1, 1], [], []>} : vector<2x8xbf16>, vector<8x512xbf16>, vector<2x512xf32> -> vector<2x512xf32>
    %c0_5 = arith.constant 0 : index
    %c0_6 = arith.constant 0 : index
    %6 = vector.load %arg4[%c0_5, %c0_6] : memref<4x512xbf16, #tpu.memory_space<vmem>>, vector<4x512xbf16>
    %cst_7 = arith.constant dense<0.000000e+00> : vector<2x512xf32>
    %7 = tpu.matmul %3, %6, %cst_7 {dimension_numbers = #tpu.dot_dimension_numbers<[1], [0], [0], [1], [0, 0, 1, 1], [], []>} : vector<2x4xbf16>, vector<4x512xbf16>, vector<2x512xf32> -> vector<2x512xf32>
    %8 = arith.addf %5, %7 : vector<2x512xf32>
    %c0_8 = arith.constant 0 : index
    %c0_9 = arith.constant 0 : index
    %9 = vector.load %arg5[%c0_8, %c0_9] : memref<1x512xf32, #tpu.memory_space<vmem>>, vector<1x512xf32>
    %10 = vector.broadcast %9 : vector<1x512xf32> to vector<2x512xf32>
    %11 = arith.addf %8, %10 : vector<2x512xf32>
    %cst_10 = arith.constant 0.000000e+00 : f32
    %12 = vector.broadcast %cst_10 : f32 to vector<2x512xf32>
    %13 = arith.maximumf %11, %12 : vector<2x512xf32>
    %14 = arith.truncf %13 : vector<2x512xf32> to vector<2x512xbf16>
    %15 = vector.extract_strided_slice %14 {offsets = [0, 0], sizes = [2, 256], strides = [1, 1]} : vector<2x512xbf16> to vector<2x256xbf16>
    %16 = vector.extract_strided_slice %14 {offsets = [0, 256], sizes = [2, 256], strides = [1, 1]} : vector<2x512xbf16> to vector<2x256xbf16>
    %c0_11 = arith.constant 0 : index
    %c0_12 = arith.constant 0 : index
    %17 = vector.load %arg6[%c0_11, %c0_12] : memref<256x256xbf16, #tpu.memory_space<vmem>>, vector<256x256xbf16>
    %cst_13 = arith.constant dense<0.000000e+00> : vector<2x256xf32>
    %18 = tpu.matmul %15, %17, %cst_13 {dimension_numbers = #tpu.dot_dimension_numbers<[1], [0], [0], [1], [0, 0, 1, 1], [], []>} : vector<2x256xbf16>, vector<256x256xbf16>, vector<2x256xf32> -> vector<2x256xf32>
    %c0_14 = arith.constant 0 : index
    %c0_15 = arith.constant 0 : index
    %19 = vector.load %arg7[%c0_14, %c0_15] : memref<1x256xf32, #tpu.memory_space<vmem>>, vector<1x256xf32>
    %20 = vector.broadcast %19 : vector<1x256xf32> to vector<2x256xf32>
    %21 = arith.addf %18, %20 : vector<2x256xf32>
    %cst_16 = arith.constant 0.000000e+00 : f32
    %22 = vector.broadcast %cst_16 : f32 to vector<2x256xf32>
    %23 = arith.maximumf %21, %22 : vector<2x256xf32>
    %c0_17 = arith.constant 0 : index
    %c0_18 = arith.constant 0 : index
    %24 = vector.load %arg10[%c0_17, %c0_18] : memref<1x256xf32, #tpu.memory_space<vmem>>, vector<1x256xf32>
    %25 = vector.broadcast %24 : vector<1x256xf32> to vector<2x256xf32>
    %26 = arith.mulf %23, %25 : vector<2x256xf32>
    %cst_19 = arith.constant dense<0.000000e+00> : vector<2xf32>
    %27 = vector.multi_reduction <add>, %26, %cst_19 [1] : vector<2x256xf32> to vector<2xf32>
    %28 = vector.shape_cast %27 : vector<2xf32> to vector<2x1xf32>
    %c0_20 = arith.constant 0 : index
    %c0_21 = arith.constant 0 : index
    %29 = vector.load %arg8[%c0_20, %c0_21] : memref<256x256xbf16, #tpu.memory_space<vmem>>, vector<256x256xbf16>
    %cst_22 = arith.constant dense<0.000000e+00> : vector<2x256xf32>
    %30 = tpu.matmul %16, %29, %cst_22 {dimension_numbers = #tpu.dot_dimension_numbers<[1], [0], [0], [1], [0, 0, 1, 1], [], []>} : vector<2x256xbf16>, vector<256x256xbf16>, vector<2x256xf32> -> vector<2x256xf32>
    %c0_23 = arith.constant 0 : index
    %c0_24 = arith.constant 0 : index
    %31 = vector.load %arg9[%c0_23, %c0_24] : memref<1x256xf32, #tpu.memory_space<vmem>>, vector<1x256xf32>
    %32 = vector.broadcast %31 : vector<1x256xf32> to vector<2x256xf32>
    %33 = arith.addf %30, %32 : vector<2x256xf32>
    %cst_25 = arith.constant 0.000000e+00 : f32
    %34 = vector.broadcast %cst_25 : f32 to vector<2x256xf32>
    %35 = arith.maximumf %33, %34 : vector<2x256xf32>
    %c0_26 = arith.constant 0 : index
    %c0_27 = arith.constant 0 : index
    %36 = vector.load %arg11[%c0_26, %c0_27] : memref<1x256xf32, #tpu.memory_space<vmem>>, vector<1x256xf32>
    %37 = vector.broadcast %36 : vector<1x256xf32> to vector<2x256xf32>
    %38 = arith.mulf %35, %37 : vector<2x256xf32>
    %cst_28 = arith.constant dense<0.000000e+00> : vector<2xf32>
    %39 = vector.multi_reduction <add>, %38, %cst_28 [1] : vector<2x256xf32> to vector<2xf32>
    %40 = vector.shape_cast %39 : vector<2xf32> to vector<2x1xf32>
    %41 = tpu.iota {dimensions = array<i32: 1>} : vector<2x128xi32>
    %c0_i32 = arith.constant 0 : i32
    %42 = vector.broadcast %c0_i32 : i32 to vector<2x128xi32>
    %43 = arith.cmpi eq, %41, %42 : vector<2x128xi32>
    %c1_i32 = arith.constant 1 : i32
    %44 = vector.broadcast %c1_i32 : i32 to vector<2x128xi32>
    %45 = arith.cmpi eq, %41, %44 : vector<2x128xi32>
    %cst_29 = arith.constant 0.000000e+00 : f32
    %46 = vector.shape_cast %40 : vector<2x1xf32> to vector<2x1xf32>
    %47 = vector.broadcast %46 : vector<2x1xf32> to vector<2x128xf32>
    %48 = vector.broadcast %cst_29 : f32 to vector<2x128xf32>
    %49 = arith.select %45, %47, %48 : vector<2x128xi1>, vector<2x128xf32>
    %50 = vector.shape_cast %28 : vector<2x1xf32> to vector<2x1xf32>
    %51 = vector.broadcast %50 : vector<2x1xf32> to vector<2x128xf32>
    %52 = arith.select %43, %51, %49 : vector<2x128xi1>, vector<2x128xf32>
    %c0_30 = arith.constant 0 : index
    %c0_31 = arith.constant 0 : index
    %53 = vector.load %arg12[%c0_30, %c0_31] : memref<1x128xf32, #tpu.memory_space<vmem>>, vector<1x128xf32>
    %54 = vector.broadcast %53 : vector<1x128xf32> to vector<2x128xf32>
    %55 = arith.addf %52, %54 : vector<2x128xf32>
    %c0_32 = arith.constant 0 : index
    %c0_33 = arith.constant 0 : index
    %56 = vector.load %arg13[%c0_32, %c0_33] : memref<2x128xf32, #tpu.memory_space<vmem>>, vector<2x128xf32>
    tpu.vector_store %arg13[%c0_32, %c0_33], %55 {strides = array<i32>} : memref<2x128xf32, #tpu.memory_space<vmem>>, vector<2x128xf32>,
    return
  }
  func.func @transform_0(%arg0: i32) -> (i32, i32) {
    %c0_i32 = arith.constant 0 : i32
    %c0_i32_0 = arith.constant 0 : i32
    return %arg0, %c0_i32 : i32, i32
  }
  func.func @transform_1(%arg0: i32) -> (i32, i32) {
    %c0_i32 = arith.constant 0 : i32
    %c0_i32_0 = arith.constant 0 : i32
    return %arg0, %c0_i32 : i32, i32
  }
  func.func @transform_2(%arg0: i32) -> (i32, i32) {
    %c0_i32 = arith.constant 0 : i32
    %c0_i32_0 = arith.constant 0 : i32
    %c0_i32_1 = arith.constant 0 : i32
    return %c0_i32, %c0_i32_0 : i32, i32
  }
  func.func @transform_3(%arg0: i32) -> (i32, i32) {
    %c0_i32 = arith.constant 0 : i32
    %c0_i32_0 = arith.constant 0 : i32
    %c0_i32_1 = arith.constant 0 : i32
    return %c0_i32, %c0_i32_0 : i32, i32
  }
  func.func @transform_4(%arg0: i32) -> (i32, i32) {
    %c0_i32 = arith.constant 0 : i32
    %c0_i32_0 = arith.constant 0 : i32
    %c0_i32_1 = arith.constant 0 : i32
    return %c0_i32, %c0_i32_0 : i32, i32
  }
  func.func @transform_5(%arg0: i32) -> (i32, i32) {
    %c0_i32 = arith.constant 0 : i32
    %c0_i32_0 = arith.constant 0 : i32
    %c0_i32_1 = arith.constant 0 : i32
    return %c0_i32, %c0_i32_0 : i32, i32
  }
  func.func @transform_6(%arg0: i32) -> (i32, i32) {
    %c0_i32 = arith.constant 0 : i32
    %c0_i32_0 = arith.constant 0 : i32
    %c0_i32_1 = arith.constant 0 : i32
    return %c0_i32, %c0_i32_0 : i32, i32
  }
  func.func @transform_7(%arg0: i32) -> (i32, i32) {
    %c0_i32 = arith.constant 0 : i32
    %c0_i32_0 = arith.constant 0 : i32
    %c0_i32_1 = arith.constant 0 : i32
    return %c0_i32, %c0_i32_0 : i32, i32
  }
  func.func @transform_8(%arg0: i32) -> (i32, i32) {
    %c0_i32 = arith.constant 0 : i32
    %c0_i32_0 = arith.constant 0 : i32
    %c0_i32_1 = arith.constant 0 : i32
    return %c0_i32, %c0_i32_0 : i32, i32
  }
  func.func @transform_9(%arg0: i32) -> (i32, i32) {
    %c0_i32 = arith.constant 0 : i32
    %c0_i32_0 = arith.constant 0 : i32
    %c0_i32_1 = arith.constant 0 : i32
    return %c0_i32, %c0_i32_0 : i32, i32
  }
  func.func @transform_10(%arg0: i32) -> (i32, i32) {
    %c0_i32 = arith.constant 0 : i32
    %c0_i32_0 = arith.constant 0 : i32
    %c0_i32_1 = arith.constant 0 : i32
    return %c0_i32, %c0_i32_0 : i32, i32
  }
  func.func @transform_11(%arg0: i32) -> (i32, i32) {
    %c0_i32 = arith.constant 0 : i32
    %c0_i32_0 = arith.constant 0 : i32
    %c0_i32_1 = arith.constant 0 : i32
    return %c0_i32, %c0_i32_0 : i32, i32
  }
  func.func @transform_12(%arg0: i32) -> (i32, i32) {
    %c0_i32 = arith.constant 0 : i32
    %c0_i32_0 = arith.constant 0 : i32
    return %arg0, %c0_i32 : i32, i32
  }
}

</mosaic_0001>

<llo_original>
// kernel: sac_critic_forward.1
$region0: #{sac_critic_forward.1}
  #allocation0 [shape = 'u32[]', space=smem, size = 0x4, offset = 0x4, fixed_abs, tag = 'smem constant byte address 0x4 - core index']
  #allocation1 [shape = 'u32[144,128]{1,0:T(1,128)}', space=vmem, size = 0x12000, scoped, tag = 'internal scratch']
  %s0 = inlined_call_operand.vmem [shape: f32[2,8], index: 0, kind: input, shape index: {}]
  %s1 = inlined_call_operand.vmem [shape: f32[2,4], index: 1, kind: input, shape index: {}]
  %s2 = inlined_call_operand.vmem [shape: bf16[8,512], index: 2, kind: input, shape index: {}]
  %s3 = inlined_call_operand.hbm [shape: bf16[4,512], index: 3, kind: input, shape index: {}]
  %s4 = inlined_call_operand.hbm [shape: f32[1,512], index: 4, kind: input, shape index: {}]
  %s5 = inlined_call_operand.hbm [shape: bf16[256,256], index: 5, kind: input, shape index: {}]
  %s6 = inlined_call_operand.hbm [shape: f32[1,256], index: 6, kind: input, shape index: {}]
  %s7 = inlined_call_operand.hbm [shape: bf16[256,256], index: 7, kind: input, shape index: {}]
  %s8 = inlined_call_operand.hbm [shape: f32[1,256], index: 8, kind: input, shape index: {}]
  %s9 = inlined_call_operand.hbm [shape: f32[1,256], index: 9, kind: input, shape index: {}]
  %s10 = inlined_call_operand.hbm [shape: f32[1,256], index: 10, kind: input, shape index: {}]
  %s11 = inlined_call_operand.hbm [shape: f32[1,128], index: 11, kind: input, shape index: {}]
  %s12 = inlined_call_operand.vmem [shape: f32[2,128], index: 12, kind: output, shape index: {}]
  %s13 = sld [smem:[#allocation0]]
  $region94: #{sac_critic_forward.1} parent=0
    _
  %s15 = ssub.s32 1, %s13
  %s16 = scalar_select 0, %s15, %s13
  $region1: #{sac_critic_forward.1} parent=0
    #allocation2 [shape = 'u8[4096]{0}', space=vmem, size = 0x1000, scoped, tag = 'input window, operand 3, single buffered']
    #allocation3 [shape = 's32[1]{0}', space=sflag, size = 0x4, scoped, tag = 'scoped memory for sac_critic_forward.1']
    #allocation4 [shape = 'u8[2048]{0}', space=vmem, size = 0x800, scoped, tag = 'input window, operand 4, single buffered']
    #allocation5 [shape = 's32[1]{0}', space=sflag, size = 0x4, scoped, tag = 'scoped memory for sac_critic_forward.1']
    #allocation6 [shape = 'u8[131072]{0}', space=vmem, size = 0x20000, scoped, tag = 'input window, operand 5, single buffered']
    #allocation7 [shape = 'u8[1024]{0}', space=vmem, size = 0x400, scoped, tag = 'input window, operand 6, single buffered']
    #allocation8 [shape = 's32[1]{0}', space=sflag, size = 0x4, scoped, tag = 'scoped memory for sac_critic_forward.1']
    #allocation9 [shape = 'u8[131072]{0}', space=vmem, size = 0x20000, scoped, tag = 'input window, operand 7, single buffered']
    #allocation10 [shape = 'u8[1024]{0}', space=vmem, size = 0x400, scoped, tag = 'input window, operand 8, single buffered']
    #allocation11 [shape = 's32[1]{0}', space=sflag, size = 0x4, scoped, tag = 'scoped memory for sac_critic_forward.1']
    #allocation12 [shape = 'u8[1024]{0}', space=vmem, size = 0x400, scoped, tag = 'input window, operand 9, single buffered']
    #allocation13 [shape = 'u8[1024]{0}', space=vmem, size = 0x400, scoped, tag = 'input window, operand 10, single buffered']
    #allocation14 [shape = 's32[1]{0}', space=sflag, size = 0x4, scoped, tag = 'scoped memory for sac_critic_forward.1']
    #allocation15 [shape = 'u8[512]{0}', space=vmem, size = 0x400, scoped, tag = 'input window, operand 11, single buffered']
    %17 = vsyncpa [#allocation3], 0
    %18 = vsyncpa [#allocation5], 0
    %19 = vsyncpa [#allocation8], 0
    %20 = vsyncpa [#allocation11], 0
    %21 = vsyncpa [#allocation14], 0
    // Predicated region
    $region2: #{sac_critic_forward.1} parent=1 // pred_check
      _
    $region3: #{sac_critic_forward.1} parent=1 // pred_check_branch
      %23 = sbr.rel (0) target = $region5
    $region4: #{sac_critic_forward.1} parent=1 // pred_region
      _
    $region5: #{sac_critic_forward.1} parent=1 // pred_fallthru
      _
    // Predicated region
    $region6: #{sac_critic_forward.1} parent=1 // pred_check
      _
    $region7: #{sac_critic_forward.1} parent=1 // pred_check_branch
      %25 = sbr.rel (0) target = $region9
    $region8: #{sac_critic_forward.1} parent=1 // pred_region
      _
    $region9: #{sac_critic_forward.1} parent=1 // pred_fallthru
      _
    // Predicated region
    $region10: #{sac_critic_forward.1} parent=1 // pred_check
      _
    $region11: #{sac_critic_forward.1} parent=1 // pred_check_branch
      %27 = sbr.rel (0) target = $region13
    $region12: #{sac_critic_forward.1} parent=1 // pred_region
      _
    $region13: #{sac_critic_forward.1} parent=1 // pred_fallthru
      _
    // Predicated region
    $region14: #{sac_critic_forward.1} parent=1 // pred_check
      _
    $region15: #{sac_critic_forward.1} parent=1 // pred_check_branch
      %29 = sbr.rel (0) target = $region17
    $region16: #{sac_critic_forward.1} parent=1 // pred_region
      %s31 = ssub.s32 128, 128
      %32 = vsyncadd [#allocation3], %s31
      %s34 = sshll.u32 [#allocation2], 4
      %s35 = int_to_ptr.vmem [resolvable:$true] %s34
      %37 = dma.hbm_to_vmem [thread:$0]  %s3, 128, %s35, [#allocation3]
    $region17: #{sac_critic_forward.1} parent=1 // pred_fallthru
      _
    // Predicated region
    $region18: #{sac_critic_forward.1} parent=1 // pred_check
      _
    $region19: #{sac_critic_forward.1} parent=1 // pred_check_branch
      %39 = sbr.rel (0) target = $region21
    $region20: #{sac_critic_forward.1} parent=1 // pred_region
      %s41 = ssub.s32 64, 64
      %42 = vsyncadd [#allocation5], %s41
      %s44 = sshll.u32 [#allocation4], 4
      %s45 = int_to_ptr.vmem [resolvable:$true] %s44
      %47 = dma.hbm_to_vmem [thread:$0]  %s4, 64, %s45, [#allocation5]
    $region21: #{sac_critic_forward.1} parent=1 // pred_fallthru
      _
    // Predicated region
    $region22: #{sac_critic_forward.1} parent=1 // pred_check
      _
    $region23: #{sac_critic_forward.1} parent=1 // pred_check_branch
      %49 = sbr.rel (0) target = $region25
    $region24: #{sac_critic_forward.1} parent=1 // pred_region
      %s51 = ssub.s32 4096, 4096
      %52 = vsyncadd [#allocation5], %s51
      %s53 = sshll.u32 [#allocation6], 4
      %s54 = int_to_ptr.vmem [resolvable:$true] %s53
      %59 = dma.hbm_to_vmem [thread:$0]  %s5, 4096, %s54, [#allocation5], 128, 128, 8
    $region25: #{sac_critic_forward.1} parent=1 // pred_fallthru
      _
    // Predicated region
    $region26: #{sac_critic_forward.1} parent=1 // pred_check
      _
    $region27: #{sac_critic_forward.1} parent=1 // pred_check_branch
      %61 = sbr.rel (0) target = $region29
    $region28: #{sac_critic_forward.1} parent=1 // pred_region
      %s63 = ssub.s32 32, 32
      %64 = vsyncadd [#allocation8], %s63
      %s66 = sshll.u32 [#allocation7], 4
      %s67 = int_to_ptr.vmem [resolvable:$true] %s66
      %69 = dma.hbm_to_vmem [thread:$0]  %s6, 32, %s67, [#allocation8]
    $region29: #{sac_critic_forward.1} parent=1 // pred_fallthru
      _
    // Predicated region
    $region30: #{sac_critic_forward.1} parent=1 // pred_check
      _
    $region31: #{sac_critic_forward.1} parent=1 // pred_check_branch
      %71 = sbr.rel (0) target = $region33
    $region32: #{sac_critic_forward.1} parent=1 // pred_region
      %s73 = ssub.s32 4096, 4096
      %74 = vsyncadd [#allocation8], %s73
      %s75 = sshll.u32 [#allocation9], 4
      %s76 = int_to_ptr.vmem [resolvable:$true] %s75
      %81 = dma.hbm_to_vmem [thread:$0]  %s7, 4096, %s76, [#allocation8], 128, 128, 8
    $region33: #{sac_critic_forward.1} parent=1 // pred_fallthru
      _
    // Predicated region
    $region34: #{sac_critic_forward.1} parent=1 // pred_check
      _
    $region35: #{sac_critic_forward.1} parent=1 // pred_check_branch
      %83 = sbr.rel (0) target = $region37
    $region36: #{sac_critic_forward.1} parent=1 // pred_region
      %s85 = ssub.s32 32, 32
      %86 = vsyncadd [#allocation11], %s85
      %s88 = sshll.u32 [#allocation10], 4
      %s89 = int_to_ptr.vmem [resolvable:$true] %s88
      %91 = dma.hbm_to_vmem [thread:$0]  %s8, 32, %s89, [#allocation11]
    $region37: #{sac_critic_forward.1} parent=1 // pred_fallthru
      _
    // Predicated region
    $region38: #{sac_critic_forward.1} parent=1 // pred_check
      _
    $region39: #{sac_critic_forward.1} parent=1 // pred_check_branch
      %93 = sbr.rel (0) target = $region41
    $region40: #{sac_critic_forward.1} parent=1 // pred_region
      %s95 = ssub.s32 32, 32
      %96 = vsyncadd [#allocation11], %s95
      %s98 = sshll.u32 [#allocation12], 4
      %s99 = int_to_ptr.vmem [resolvable:$true] %s98
      %101 = dma.hbm_to_vmem [thread:$0]  %s9, 32, %s99, [#allocation11]
    $region41: #{sac_critic_forward.1} parent=1 // pred_fallthru
      _
    // Predicated region
    $region42: #{sac_critic_forward.1} parent=1 // pred_check
      _
    $region43: #{sac_critic_forward.1} parent=1 // pred_check_branch
      %103 = sbr.rel (0) target = $region45
    $region44: #{sac_critic_forward.1} parent=1 // pred_region
      %s105 = ssub.s32 32, 32
      %106 = vsyncadd [#allocation14], %s105
      %s108 = sshll.u32 [#allocation13], 4
      %s109 = int_to_ptr.vmem [resolvable:$true] %s108
      %111 = dma.hbm_to_vmem [thread:$0]  %s10, 32, %s109, [#allocation14]
    $region45: #{sac_critic_forward.1} parent=1 // pred_fallthru
      _
    // Predicated region
    $region46: #{sac_critic_forward.1} parent=1 // pred_check
      _
    $region47: #{sac_critic_forward.1} parent=1 // pred_check_branch
      %113 = sbr.rel (0) target = $region49
    $region48: #{sac_critic_forward.1} parent=1 // pred_region
      %s115 = ssub.s32 16, 16
      %116 = vsyncadd [#allocation14], %s115
      %s118 = sshll.u32 [#allocation15], 4
      %s119 = int_to_ptr.vmem [resolvable:$true] %s118
      %121 = dma.hbm_to_vmem [thread:$0]  %s11, 16, %s119, [#allocation14]
    $region49: #{sac_critic_forward.1} parent=1 // pred_fallthru
      _
    // Predicated region
    $region50: #{sac_critic_forward.1} parent=1 // pred_check
      _
    $region51: #{sac_critic_forward.1} parent=1 // pred_check_branch
      %123 = sbr.rel (0) target = $region53
    $region52: #{sac_critic_forward.1} parent=1 // pred_region
      %124 = dma.done [#allocation3], 128
    $region53: #{sac_critic_forward.1} parent=1 // pred_fallthru
      _
    // Predicated region
    $region54: #{sac_critic_forward.1} parent=1 // pred_check
      _
    $region55: #{sac_critic_forward.1} parent=1 // pred_check_branch
      %126 = sbr.rel (0) target = $region57
    $region56: #{sac_critic_forward.1} parent=1 // pred_region
      %127 = dma.done [#allocation5], 64
    $region57: #{sac_critic_forward.1} parent=1 // pred_fallthru
      _
    // Predicated region
    $region58: #{sac_critic_forward.1} parent=1 // pred_check
      _
    $region59: #{sac_critic_forward.1} parent=1 // pred_check_branch
      %129 = sbr.rel (0) target = $region61
    $region60: #{sac_critic_forward.1} parent=1 // pred_region
      %130 = dma.done [#allocation5], 4096
    $region61: #{sac_critic_forward.1} parent=1 // pred_fallthru
      _
    // Predicated region
    $region62: #{sac_critic_forward.1} parent=1 // pred_check
      _
    $region63: #{sac_critic_forward.1} parent=1 // pred_check_branch
      %132 = sbr.rel (0) target = $region65
    $region64: #{sac_critic_forward.1} parent=1 // pred_region
      %133 = dma.done [#allocation8], 32
    $region65: #{sac_critic_forward.1} parent=1 // pred_fallthru
      _
    // Predicated region
    $region66: #{sac_critic_forward.1} parent=1 // pred_check
      _
    $region67: #{sac_critic_forward.1} parent=1 // pred_check_branch
      %135 = sbr.rel (0) target = $region69
    $region68: #{sac_critic_forward.1} parent=1 // pred_region
      %136 = dma.done [#allocation8], 4096
    $region69: #{sac_critic_forward.1} parent=1 // pred_fallthru
      _
    // Predicated region
    $region70: #{sac_critic_forward.1} parent=1 // pred_check
      _
    $region71: #{sac_critic_forward.1} parent=1 // pred_check_branch
      %138 = sbr.rel (0) target = $region73
    $region72: #{sac_critic_forward.1} parent=1 // pred_region
      %139 = dma.done [#allocation11], 32
    $region73: #{sac_critic_forward.1} parent=1 // pred_fallthru
      _
    // Predicated region
    $region74: #{sac_critic_forward.1} parent=1 // pred_check
      _
    $region75: #{sac_critic_forward.1} parent=1 // pred_check_branch
      %141 = sbr.rel (0) target = $region77
    $region76: #{sac_critic_forward.1} parent=1 // pred_region
      %142 = dma.done [#allocation11], 32
    $region77: #{sac_critic_forward.1} parent=1 // pred_fallthru
      _
    // Predicated region
    $region78: #{sac_critic_forward.1} parent=1 // pred_check
      _
    $region79: #{sac_critic_forward.1} parent=1 // pred_check_branch
      %144 = sbr.rel (0) target = $region81
    $region80: #{sac_critic_forward.1} parent=1 // pred_region
      %145 = dma.done [#allocation14], 32
    $region81: #{sac_critic_forward.1} parent=1 // pred_fallthru
      _
    // Predicated region
    $region82: #{sac_critic_forward.1} parent=1 // pred_check
      _
    $region83: #{sac_critic_forward.1} parent=1 // pred_check_branch
      %147 = sbr.rel (0) target = $region85
    $region84: #{sac_critic_forward.1} parent=1 // pred_region
      %148 = dma.done [#allocation14], 16
    $region85: #{sac_critic_forward.1} parent=1 // pred_fallthru
      _
    %v150 = vld [vmem:[%s0] sm:$0x3]
    %v151 = vpack.c.bf16 %v150, %v150
    %v152 = vld [vmem:[%s1] sm:$0x3]
    %v153 = vpack.c.bf16 %v152, %v152
    %v154 = vld [vmem:[%s2] sm:$0xff]
    %v155 = vld [vmem:[%s2 + $0x8] sm:$0xff]
    %v156 = vld [vmem:[#allocation2] sm:$0xff]
    %v158 = vcombine.high %v156, %v156
    %v160 = vunpack.c.l.s4 1983009808
    %v161 = vunpack.c.0.s8 %v160
    %v162 = vlaneseq
    %v163 = vshrl.u32 %v162, 7
    %v164 = vsub.s32 %v161, %v163
    %v165 = vrot.slane %v156, %v164
    %v167 = vunpack.c.l.s4 1983009808
    %v168 = vunpack.c.0.s8 %v167
    %v169 = vlaneseq
    %v170 = vshrl.u32 %v169, 7
    %v171 = vsub.s32 %v168, %v170
    %v172 = vrot.slane %v158, %v171
    %v173 = vcombine.high %v165, %v165
    %v174 = vcombine.high %v172, %v172
    %vm175 = vcmask 31744
    %v177 = vsel %vm175, %v153, 0
    %vm179 = vcmask 1041408
    %v181 = vsel %vm179, %v165, 0
    %v184 = vsel %vm179, %v173, 0
    %v187 = vsel %vm179, %v172, 0
    %v190 = vsel %vm179, %v174, 0
    %192 = vmatprep.subr.bf16.mxu0 0
    %193 = vmatpush1.bf16.msra.mxu0 0
    %194 = vmatprep.subr.bf16.mxu0 0
    %195 = vmatpush1.bf16.msra.mxu0 0
    %196 = vmatprep.subr.bf16.mxu0 0
    %197 = vmatpush1.bf16.msra.mxu0 0
    %198 = vmatprep.subr.bf16.mxu0 0
    %199 = vmatpush1.bf16.msra.mxu0 0
    %200 = vmatprep.subr.bf16.mxu0 0
    %201 = vmatpush1.bf16.msra.mxu0 0
    %202 = vmatprep.subr.bf16.mxu0 0
    %203 = vmatpush1.bf16.msra.mxu0 0
    %204 = vmatprep.subr.bf16.mxu0 0
    %205 = vmatpush1.bf16.msra.mxu0 0
    %206 = vmatprep.subr.bf16.mxu0 %v184
    %207 = vmatpush1.bf16.msra.mxu0 %v181
    %208 = vmatprep.subr.bf16.mxu0 0
    %209 = vmatpush2.bf16.msra.mxu0 0
    %210 = vmatprep.subr.bf16.mxu0 0
    %211 = vmatpush2.bf16.msra.mxu0 0
    %212 = vmatprep.subr.bf16.mxu0 0
    %213 = vmatpush2.bf16.msra.mxu0 0
    %214 = vmatprep.subr.bf16.mxu0 0
    %215 = vmatpush2.bf16.msra.mxu0 0
    %216 = vmatprep.subr.bf16.mxu0 0
    %217 = vmatpush2.bf16.msra.mxu0 0
    %218 = vmatprep.subr.bf16.mxu0 0
    %219 = vmatpush2.bf16.msra.mxu0 0
    %220 = vmatprep.subr.bf16.mxu0 0
    %221 = vmatpush2.bf16.msra.mxu0 0
    %222 = vmatprep.subr.bf16.mxu0 0
    %223 = vmatpush2.bf16.msra.mxu0 0
    %224 = vmatprep.mubr.bf16.mxu0 0
    %225 = vmatmul.mubr.bf16.gmra.mxu0 %v177
    %v226 = vpop.f32.mrf.mxu0
    %v227 = vadd.f32 0.0, %v226
    %v228 = vpop.f32.mrf.mxu0
    %v229 = vadd.f32 0.0, %v228
    %v230 = vpop.f32.mrf.mxu0
    %v231 = vpop.f32.mrf.mxu0
    %232 = vdwg.mxu0
    %233 = vmatprep.subr.bf16.mxu0 0
    %234 = vmatpush1.bf16.msra.mxu0 0
    %235 = vmatprep.subr.bf16.mxu0 0
    %236 = vmatpush1.bf16.msra.mxu0 0
    %237 = vmatprep.subr.bf16.mxu0 0
    %238 = vmatpush1.bf16.msra.mxu0 0
    %239 = vmatprep.subr.bf16.mxu0 0
    %240 = vmatpush1.bf16.msra.mxu0 0
    %241 = vmatprep.subr.bf16.mxu0 0
    %242 = vmatpush1.bf16.msra.mxu0 0
    %243 = vmatprep.subr.bf16.mxu0 0
    %244 = vmatpush1.bf16.msra.mxu0 0
    %245 = vmatprep.subr.bf16.mxu0 0
    %246 = vmatpush1.bf16.msra.mxu0 0
    %247 = vmatprep.subr.bf16.mxu0 %v190
    %248 = vmatpush1.bf16.msra.mxu0 %v187
    %249 = vmatprep.subr.bf16.mxu0 0
    %250 = vmatpush2.bf16.msra.mxu0 0
    %251 = vmatprep.subr.bf16.mxu0 0
    %252 = vmatpush2.bf16.msra.mxu0 0
    %253 = vmatprep.subr.bf16.mxu0 0
    %254 = vmatpush2.bf16.msra.mxu0 0
    %255 = vmatprep.subr.bf16.mxu0 0
    %256 = vmatpush2.bf16.msra.mxu0 0
    %257 = vmatprep.subr.bf16.mxu0 0
    %258 = vmatpush2.bf16.msra.mxu0 0
    %259 = vmatprep.subr.bf16.mxu0 0
    %260 = vmatpush2.bf16.msra.mxu0 0
    %261 = vmatprep.subr.bf16.mxu0 0
    %262 = vmatpush2.bf16.msra.mxu0 0
    %263 = vmatprep.subr.bf16.mxu0 0
    %264 = vmatpush2.bf16.msra.mxu0 0
    %265 = vmatprep.mubr.bf16.mxu0 0
    %266 = vmatmul.mubr.bf16.gmra.mxu0 %v177
    %v267 = vpop.f32.mrf.mxu0
    %v268 = vadd.f32 0.0, %v267
    %v269 = vpop.f32.mrf.mxu0
    %v270 = vadd.f32 0.0, %v269
    %v271 = vpop.f32.mrf.mxu0
    %v272 = vpop.f32.mrf.mxu0
    %273 = vdwg.mxu0
    %v276 = vunpack.c.l.b16 %v154
    %v277 = vunpack.c.h.b16 %v154
    %v278 = vunpack.c.l.b16 %v155
    %v279 = vunpack.c.h.b16 %v155
    %v280 = vpack.c.b16 %v276, %v276
    %v281 = vpack.c.b16 %v277, %v277
    %v282 = vpack.c.b16 %v278, %v278
    %v283 = vpack.c.b16 %v279, %v279
    %vm284 = vcmask 64512
    %v286 = vsel %vm284, %v151, 0
    %vm288 = vcmask 1043456
    %v290 = vsel %vm288, %v280, 0
    %v293 = vsel %vm288, %v281, 0
    %v296 = vsel %vm288, %v282, 0
    %v299 = vsel %vm288, %v283, 0
    %301 = vmatprep.subr.bf16.mxu0 0
    %302 = vmatpush1.bf16.msra.mxu0 0
    %303 = vmatprep.subr.bf16.mxu0 0
    %304 = vmatpush1.bf16.msra.mxu0 0
    %305 = vmatprep.subr.bf16.mxu0 0
    %306 = vmatpush1.bf16.msra.mxu0 0
    %307 = vmatprep.subr.bf16.mxu0 0
    %308 = vmatpush1.bf16.msra.mxu0 0
    %309 = vmatprep.subr.bf16.mxu0 0
    %310 = vmatpush1.bf16.msra.mxu0 0
    %311 = vmatprep.subr.bf16.mxu0 0
    %312 = vmatpush1.bf16.msra.mxu0 0
    %313 = vmatprep.subr.bf16.mxu0 0
    %314 = vmatpush1.bf16.msra.mxu0 0
    %315 = vmatprep.subr.bf16.mxu0 %v293
    %316 = vmatpush1.bf16.msra.mxu0 %v290
    %317 = vmatprep.subr.bf16.mxu0 0
    %318 = vmatpush2.bf16.msra.mxu0 0
    %319 = vmatprep.subr.bf16.mxu0 0
    %320 = vmatpush2.bf16.msra.mxu0 0
    %321 = vmatprep.subr.bf16.mxu0 0
    %322 = vmatpush2.bf16.msra.mxu0 0
    %323 = vmatprep.subr.bf16.mxu0 0
    %324 = vmatpush2.bf16.msra.mxu0 0
    %325 = vmatprep.subr.bf16.mxu0 0
    %326 = vmatpush2.bf16.msra.mxu0 0
    %327 = vmatprep.subr.bf16.mxu0 0
    %328 = vmatpush2.bf16.msra.mxu0 0
    %329 = vmatprep.subr.bf16.mxu0 0
    %330 = vmatpush2.bf16.msra.mxu0 0
    %331 = vmatprep.subr.bf16.mxu0 0
    %332 = vmatpush2.bf16.msra.mxu0 0
    %333 = vmatprep.mubr.bf16.mxu0 0
    %334 = vmatmul.mubr.bf16.gmra.mxu0 %v286
    %v335 = vpop.f32.mrf.mxu0
    %v336 = vadd.f32 %v227, %v335
    %v337 = vpop.f32.mrf.mxu0
    %v338 = vadd.f32 %v229, %v337
    %v339 = vpop.f32.mrf.mxu0
    %v340 = vpop.f32.mrf.mxu0
    %341 = vdwg.mxu0
    %342 = vmatprep.subr.bf16.mxu0 0
    %343 = vmatpush1.bf16.msra.mxu0 0
    %344 = vmatprep.subr.bf16.mxu0 0
    %345 = vmatpush1.bf16.msra.mxu0 0
    %346 = vmatprep.subr.bf16.mxu0 0
    %347 = vmatpush1.bf16.msra.mxu0 0
    %348 = vmatprep.subr.bf16.mxu0 0
    %349 = vmatpush1.bf16.msra.mxu0 0
    %350 = vmatprep.subr.bf16.mxu0 0
    %351 = vmatpush1.bf16.msra.mxu0 0
    %352 = vmatprep.subr.bf16.mxu0 0
    %353 = vmatpush1.bf16.msra.mxu0 0
    %354 = vmatprep.subr.bf16.mxu0 0
    %355 = vmatpush1.bf16.msra.mxu0 0
    %356 = vmatprep.subr.bf16.mxu0 %v299
    %357 = vmatpush1.bf16.msra.mxu0 %v296
    %358 = vmatprep.subr.bf16.mxu0 0
    %359 = vmatpush2.bf16.msra.mxu0 0
    %360 = vmatprep.subr.bf16.mxu0 0
    %361 = vmatpush2.bf16.msra.mxu0 0
    %362 = vmatprep.subr.bf16.mxu0 0
    %363 = vmatpush2.bf16.msra.mxu0 0
    %364 = vmatprep.subr.bf16.mxu0 0
    %365 = vmatpush2.bf16.msra.mxu0 0
    %366 = vmatprep.subr.bf16.mxu0 0
    %367 = vmatpush2.bf16.msra.mxu0 0
    %368 = vmatprep.subr.bf16.mxu0 0
    %369 = vmatpush2.bf16.msra.mxu0 0
    %370 = vmatprep.subr.bf16.mxu0 0
    %371 = vmatpush2.bf16.msra.mxu0 0
    %372 = vmatprep.subr.bf16.mxu0 0
    %373 = vmatpush2.bf16.msra.mxu0 0
    %374 = vmatprep.mubr.bf16.mxu0 0
    %375 = vmatmul.mubr.bf16.gmra.mxu0 %v286
    %v376 = vpop.f32.mrf.mxu0
    %v377 = vadd.f32 %v268, %v376
    %v378 = vpop.f32.mrf.mxu0
    %v379 = vadd.f32 %v270, %v378
    %v380 = vpop.f32.mrf.mxu0
    %v381 = vpop.f32.mrf.mxu0
    %382 = vdwg.mxu0
    %v383 = vld [vmem:[#allocation4] sm:$0xf]
    %v385 = vlaneseq
    %v386 = vshrl.u32 %v385, 7
    %v387 = vsub.s32 0, %v386
    %v388 = vrot.slane %v383, %v387
    %v389 = vlaneseq
    %v390 = vshrl.u32 %v389, 7
    %v391 = vsub.s32 1, %v390
    %v392 = vrot.slane %v383, %v391
    %v393 = vlaneseq
    %v394 = vshrl.u32 %v393, 7
    %v395 = vsub.s32 2, %v394
    %v396 = vrot.slane %v383, %v395
    %v397 = vlaneseq
    %v398 = vshrl.u32 %v397, 7
    %v399 = vsub.s32 3, %v398
    %v400 = vrot.slane %v383, %v399
    %v405 = vadd.f32 %v336, %v388
    %v406 = vadd.f32 %v338, %v392
    %v407 = vadd.f32 %v377, %v396
    %v408 = vadd.f32 %v379, %v400
    %v409 = vmax.f32 %v405, 0.0
    %v410 = vmax.f32 %v406, 0.0
    %v411 = vmax.f32 %v407, 0.0
    %v412 = vmax.f32 %v408, 0.0
    %v413 = vpack.c.bf16 %v409, %v409
    %v414 = vpack.c.bf16 %v410, %v410
    %v415 = vpack.c.bf16 %v411, %v411
    %v416 = vpack.c.bf16 %v412, %v412
    %v417 = vld [vmem:[#allocation6] sm:$0xff]
    %v418 = vld [vmem:[#allocation6 + $0x8] sm:$0xff]
    %v419 = vld [vmem:[#allocation6 + $0x10] sm:$0xff]
    %v420 = vld [vmem:[#allocation6 + $0x18] sm:$0xff]
    %v421 = vld [vmem:[#allocation6 + $0x20] sm:$0xff]
    %v422 = vld [vmem:[#allocation6 + $0x28] sm:$0xff]
    %v423 = vld [vmem:[#allocation6 + $0x30] sm:$0xff]
    %v424 = vld [vmem:[#allocation6 + $0x38] sm:$0xff]
    %v425 = vld [vmem:[#allocation6 + $0x40] sm:$0xff]
    %v426 = vld [vmem:[#allocation6 + $0x48] sm:$0xff]
    %v427 = vld [vmem:[#allocation6 + $0x50] sm:$0xff]
    %v428 = vld [vmem:[#allocation6 + $0x58] sm:$0xff]
    %v429 = vld [vmem:[#allocation6 + $0x60] sm:$0xff]
    %v430 = vld [vmem:[#allocation6 + $0x68] sm:$0xff]
    %v431 = vld [vmem:[#allocation6 + $0x70] sm:$0xff]
    %v432 = vld [vmem:[#allocation6 + $0x78] sm:$0xff]
    %v433 = vld [vmem:[#allocation6 + $0x80] sm:$0xff]
    %v434 = vld [vmem:[#allocation6 + $0x88] sm:$0xff]
    %v435 = vld [vmem:[#allocation6 + $0x90] sm:$0xff]
    %v436 = vld [vmem:[#allocation6 + $0x98] sm:$0xff]
    %v437 = vld [vmem:[#allocation6 + $0xa0] sm:$0xff]
    %v438 = vld [vmem:[#allocation6 + $0xa8] sm:$0xff]
    %v439 = vld [vmem:[#allocation6 + $0xb0] sm:$0xff]
    %v440 = vld [vmem:[#allocation6 + $0xb8] sm:$0xff]
    %v441 = vld [vmem:[#allocation6 + $0xc0] sm:$0xff]
    %v442 = vld [vmem:[#allocation6 + $0xc8] sm:$0xff]
    %v443 = vld [vmem:[#allocation6 + $0xd0] sm:$0xff]
    %v444 = vld [vmem:[#allocation6 + $0xd8] sm:$0xff]
    %v445 = vld [vmem:[#allocation6 + $0xe0] sm:$0xff]
    %v446 = vld [vmem:[#allocation6 + $0xe8] sm:$0xff]
    %v447 = vld [vmem:[#allocation6 + $0xf0] sm:$0xff]
    %v448 = vld [vmem:[#allocation6 + $0xf8] sm:$0xff]
    %v449 = vld [vmem:[#allocation7] sm:$0x3]
    %v451 = vlaneseq
    %v452 = vshrl.u32 %v451, 7
    %v453 = vsub.s32 0, %v452
    %v454 = vrot.slane %v449, %v453
    %v455 = vlaneseq
    %v456 = vshrl.u32 %v455, 7
    %v457 = vsub.s32 1, %v456
    %v458 = vrot.slane %v449, %v457
    %v493 = vunpack.c.l.b16 %v417
    %v494 = vunpack.c.h.b16 %v417
    %v495 = vunpack.c.l.b16 %v418
    %v496 = vunpack.c.h.b16 %v418
    %v497 = vunpack.c.l.b16 %v419
    %v498 = vunpack.c.h.b16 %v419
    %v499 = vunpack.c.l.b16 %v420
    %v500 = vunpack.c.h.b16 %v420
    %v501 = vunpack.c.l.b16 %v421
    %v502 = vunpack.c.h.b16 %v421
    %v503 = vunpack.c.l.b16 %v422
    %v504 = vunpack.c.h.b16 %v422
    %v505 = vunpack.c.l.b16 %v423
    %v506 = vunpack.c.h.b16 %v423
    %v507 = vunpack.c.l.b16 %v424
    %v508 = vunpack.c.h.b16 %v424
    %v509 = vunpack.c.l.b16 %v425
    %v510 = vunpack.c.h.b16 %v425
    %v511 = vunpack.c.l.b16 %v426
    %v512 = vunpack.c.h.b16 %v426
    %v513 = vunpack.c.l.b16 %v427
    %v514 = vunpack.c.h.b16 %v427
    %v515 = vunpack.c.l.b16 %v428
    %v516 = vunpack.c.h.b16 %v428
    %v517 = vunpack.c.l.b16 %v429
    %v518 = vunpack.c.h.b16 %v429
    %v519 = vunpack.c.l.b16 %v430
    %v520 = vunpack.c.h.b16 %v430
    %v521 = vunpack.c.l.b16 %v431
    %v522 = vunpack.c.h.b16 %v431
    %v523 = vunpack.c.l.b16 %v432
    %v524 = vunpack.c.h.b16 %v432
    %v525 = vunpack.c.l.b16 %v433
    %v526 = vunpack.c.h.b16 %v433
    %v527 = vunpack.c.l.b16 %v434
    %v528 = vunpack.c.h.b16 %v434
    %v529 = vunpack.c.l.b16 %v435
    %v530 = vunpack.c.h.b16 %v435
    %v531 = vunpack.c.l.b16 %v436
    %v532 = vunpack.c.h.b16 %v436
    %v533 = vunpack.c.l.b16 %v437
    %v534 = vunpack.c.h.b16 %v437
    %v535 = vunpack.c.l.b16 %v438
    %v536 = vunpack.c.h.b16 %v438
    %v537 = vunpack.c.l.b16 %v439
    %v538 = vunpack.c.h.b16 %v439
    %v539 = vunpack.c.l.b16 %v440
    %v540 = vunpack.c.h.b16 %v440
    %v541 = vunpack.c.l.b16 %v441
    %v542 = vunpack.c.h.b16 %v441
    %v543 = vunpack.c.l.b16 %v442
    %v544 = vunpack.c.h.b16 %v442
    %v545 = vunpack.c.l.b16 %v443
    %v546 = vunpack.c.h.b16 %v443
    %v547 = vunpack.c.l.b16 %v444
    %v548 = vunpack.c.h.b16 %v444
    %v549 = vunpack.c.l.b16 %v445
    %v550 = vunpack.c.h.b16 %v445
    %v551 = vunpack.c.l.b16 %v446
    %v552 = vunpack.c.h.b16 %v446
    %v553 = vunpack.c.l.b16 %v447
    %v554 = vunpack.c.h.b16 %v447
    %v555 = vunpack.c.l.b16 %v448
    %v556 = vunpack.c.h.b16 %v448
    %v557 = vpack.c.b16 %v495, %v493
    %v558 = vpack.c.b16 %v496, %v494
    %v559 = vpack.c.b16 %v499, %v497
    %v560 = vpack.c.b16 %v500, %v498
    %v561 = vpack.c.b16 %v503, %v501
    %v562 = vpack.c.b16 %v504, %v502
    %v563 = vpack.c.b16 %v507, %v505
    %v564 = vpack.c.b16 %v508, %v506
    %v565 = vpack.c.b16 %v511, %v509
    %v566 = vpack.c.b16 %v512, %v510
    %v567 = vpack.c.b16 %v515, %v513
    %v568 = vpack.c.b16 %v516, %v514
    %v569 = vpack.c.b16 %v519, %v517
    %v570 = vpack.c.b16 %v520, %v518
    %v571 = vpack.c.b16 %v523, %v521
    %v572 = vpack.c.b16 %v524, %v522
    %v573 = vpack.c.b16 %v527, %v525
    %v574 = vpack.c.b16 %v528, %v526
    %v575 = vpack.c.b16 %v531, %v529
    %v576 = vpack.c.b16 %v532, %v530
    %v577 = vpack.c.b16 %v535, %v533
    %v578 = vpack.c.b16 %v536, %v534
    %v579 = vpack.c.b16 %v539, %v537
    %v580 = vpack.c.b16 %v540, %v538
    %v581 = vpack.c.b16 %v543, %v541
    %v582 = vpack.c.b16 %v544, %v542
    %v583 = vpack.c.b16 %v547, %v545
    %v584 = vpack.c.b16 %v548, %v546
    %v585 = vpack.c.b16 %v551, %v549
    %v586 = vpack.c.b16 %v552, %v550
    %v587 = vpack.c.b16 %v555, %v553
    %v588 = vpack.c.b16 %v556, %v554
    %621 = vmatprep.subr.bf16.mxu0 %v572
    %622 = vmatpush1.bf16.msra.mxu0 %v571
    %623 = vmatprep.subr.bf16.mxu0 %v570
    %624 = vmatpush1.bf16.msra.mxu0 %v569
    %625 = vmatprep.subr.bf16.mxu0 %v568
    %626 = vmatpush1.bf16.msra.mxu0 %v567
    %627 = vmatprep.subr.bf16.mxu0 %v566
    %628 = vmatpush1.bf16.msra.mxu0 %v565
    %629 = vmatprep.subr.bf16.mxu0 %v564
    %630 = vmatpush1.bf16.msra.mxu0 %v563
    %631 = vmatprep.subr.bf16.mxu0 %v562
    %632 = vmatpush1.bf16.msra.mxu0 %v561
    %633 = vmatprep.subr.bf16.mxu0 %v560
    %634 = vmatpush1.bf16.msra.mxu0 %v559
    %635 = vmatprep.subr.bf16.mxu0 %v558
    %636 = vmatpush1.bf16.msra.mxu0 %v557
    %637 = vmatprep.subr.bf16.mxu0 %v588
    %638 = vmatpush2.bf16.msra.mxu0 %v587
    %639 = vmatprep.subr.bf16.mxu0 %v586
    %640 = vmatpush2.bf16.msra.mxu0 %v585
    %641 = vmatprep.subr.bf16.mxu0 %v584
    %642 = vmatpush2.bf16.msra.mxu0 %v583
    %643 = vmatprep.subr.bf16.mxu0 %v582
    %644 = vmatpush2.bf16.msra.mxu0 %v581
    %645 = vmatprep.subr.bf16.mxu0 %v580
    %646 = vmatpush2.bf16.msra.mxu0 %v579
    %647 = vmatprep.subr.bf16.mxu0 %v578
    %648 = vmatpush2.bf16.msra.mxu0 %v577
    %649 = vmatprep.subr.bf16.mxu0 %v576
    %650 = vmatpush2.bf16.msra.mxu0 %v575
    %651 = vmatprep.subr.bf16.mxu0 %v574
    %652 = vmatpush2.bf16.msra.mxu0 %v573
    %653 = vmatprep.mubr.bf16.mxu0 %v414
    %654 = vmatmul.mubr.bf16.gmra.mxu0 %v413
    %v655 = vpop.f32.mrf.mxu0
    %v656 = vadd.f32 %v454, %v655
    %v657 = vpop.f32.mrf.mxu0
    %v658 = vadd.f32 %v458, %v657
    %v659 = vpop.f32.mrf.mxu0
    %v660 = vpop.f32.mrf.mxu0
    %661 = vdwg.mxu0
    %v662 = vmax.f32 %v656, 0.0
    %v663 = vmax.f32 %v658, 0.0
    %v664 = vld [vmem:[#allocation12] sm:$0x3]
    %v666 = vlaneseq
    %v667 = vshrl.u32 %v666, 7
    %v668 = vsub.s32 0, %v667
    %v669 = vrot.slane %v664, %v668
    %v670 = vlaneseq
    %v671 = vshrl.u32 %v670, 7
    %v672 = vsub.s32 1, %v671
    %v673 = vrot.slane %v664, %v672
    %v676 = vmul.f32 %v662, %v669
    %v677 = vmul.f32 %v663, %v673
    %v678 = vsel %vm179, %v676, 0.0
    %v679 = vsel %vm179, %v677, 0.0
    %v680 = vadd.f32 %v678, %v679
    %681 = vadd.xlane.f32.xlu0 %v680
    %v682 = vpop.xlane.xlu0 %681
    %v683 = vld [vmem:[#allocation9] sm:$0xff]
    %v684 = vld [vmem:[#allocation9 + $0x8] sm:$0xff]
    %v685 = vld [vmem:[#allocation9 + $0x10] sm:$0xff]
    %v686 = vld [vmem:[#allocation9 + $0x18] sm:$0xff]
    %v687 = vld [vmem:[#allocation9 + $0x20] sm:$0xff]
    %v688 = vld [vmem:[#allocation9 + $0x28] sm:$0xff]
    %v689 = vld [vmem:[#allocation9 + $0x30] sm:$0xff]
    %v690 = vld [vmem:[#allocation9 + $0x38] sm:$0xff]
    %v691 = vld [vmem:[#allocation9 + $0x40] sm:$0xff]
    %v692 = vld [vmem:[#allocation9 + $0x48] sm:$0xff]
    %v693 = vld [vmem:[#allocation9 + $0x50] sm:$0xff]
    %v694 = vld [vmem:[#allocation9 + $0x58] sm:$0xff]
    %v695 = vld [vmem:[#allocation9 + $0x60] sm:$0xff]
    %v696 = vld [vmem:[#allocation9 + $0x68] sm:$0xff]
    %v697 = vld [vmem:[#allocation9 + $0x70] sm:$0xff]
    %v698 = vld [vmem:[#allocation9 + $0x78] sm:$0xff]
    %v699 = vld [vmem:[#allocation9 + $0x80] sm:$0xff]
    %v700 = vld [vmem:[#allocation9 + $0x88] sm:$0xff]
    %v701 = vld [vmem:[#allocation9 + $0x90] sm:$0xff]
    %v702 = vld [vmem:[#allocation9 + $0x98] sm:$0xff]
    %v703 = vld [vmem:[#allocation9 + $0xa0] sm:$0xff]
    %v704 = vld [vmem:[#allocation9 + $0xa8] sm:$0xff]
    %v705 = vld [vmem:[#allocation9 + $0xb0] sm:$0xff]
    %v706 = vld [vmem:[#allocation9 + $0xb8] sm:$0xff]
    %v707 = vld [vmem:[#allocation9 + $0xc0] sm:$0xff]
    %v708 = vld [vmem:[#allocation9 + $0xc8] sm:$0xff]
    %v709 = vld [vmem:[#allocation9 + $0xd0] sm:$0xff]
    %v710 = vld [vmem:[#allocation9 + $0xd8] sm:$0xff]
    %v711 = vld [vmem:[#allocation9 + $0xe0] sm:$0xff]
    %v712 = vld [vmem:[#allocation9 + $0xe8] sm:$0xff]
    %v713 = vld [vmem:[#allocation9 + $0xf0] sm:$0xff]
    %v714 = vld [vmem:[#allocation9 + $0xf8] sm:$0xff]
    %v715 = vld [vmem:[#allocation10] sm:$0x3]
    %v717 = vlaneseq
    %v718 = vshrl.u32 %v717, 7
    %v719 = vsub.s32 0, %v718
    %v720 = vrot.slane %v715, %v719
    %v721 = vlaneseq
    %v722 = vshrl.u32 %v721, 7
    %v723 = vsub.s32 1, %v722
    %v724 = vrot.slane %v715, %v723
    %v759 = vunpack.c.l.b16 %v683
    %v760 = vunpack.c.h.b16 %v683
    %v761 = vunpack.c.l.b16 %v684
    %v762 = vunpack.c.h.b16 %v684
    %v763 = vunpack.c.l.b16 %v685
    %v764 = vunpack.c.h.b16 %v685
    %v765 = vunpack.c.l.b16 %v686
    %v766 = vunpack.c.h.b16 %v686
    %v767 = vunpack.c.l.b16 %v687
    %v768 = vunpack.c.h.b16 %v687
    %v769 = vunpack.c.l.b16 %v688
    %v770 = vunpack.c.h.b16 %v688
    %v771 = vunpack.c.l.b16 %v689
    %v772 = vunpack.c.h.b16 %v689
    %v773 = vunpack.c.l.b16 %v690
    %v774 = vunpack.c.h.b16 %v690
    %v775 = vunpack.c.l.b16 %v691
    %v776 = vunpack.c.h.b16 %v691
    %v777 = vunpack.c.l.b16 %v692
    %v778 = vunpack.c.h.b16 %v692
    %v779 = vunpack.c.l.b16 %v693
    %v780 = vunpack.c.h.b16 %v693
    %v781 = vunpack.c.l.b16 %v694
    %v782 = vunpack.c.h.b16 %v694
    %v783 = vunpack.c.l.b16 %v695
    %v784 = vunpack.c.h.b16 %v695
    %v785 = vunpack.c.l.b16 %v696
    %v786 = vunpack.c.h.b16 %v696
    %v787 = vunpack.c.l.b16 %v697
    %v788 = vunpack.c.h.b16 %v697
    %v789 = vunpack.c.l.b16 %v698
    %v790 = vunpack.c.h.b16 %v698
    %v791 = vunpack.c.l.b16 %v699
    %v792 = vunpack.c.h.b16 %v699
    %v793 = vunpack.c.l.b16 %v700
    %v794 = vunpack.c.h.b16 %v700
    %v795 = vunpack.c.l.b16 %v701
    %v796 = vunpack.c.h.b16 %v701
    %v797 = vunpack.c.l.b16 %v702
    %v798 = vunpack.c.h.b16 %v702
    %v799 = vunpack.c.l.b16 %v703
    %v800 = vunpack.c.h.b16 %v703
    %v801 = vunpack.c.l.b16 %v704
    %v802 = vunpack.c.h.b16 %v704
    %v803 = vunpack.c.l.b16 %v705
    %v804 = vunpack.c.h.b16 %v705
    %v805 = vunpack.c.l.b16 %v706
    %v806 = vunpack.c.h.b16 %v706
    %v807 = vunpack.c.l.b16 %v707
    %v808 = vunpack.c.h.b16 %v707
    %v809 = vunpack.c.l.b16 %v708
    %v810 = vunpack.c.h.b16 %v708
    %v811 = vunpack.c.l.b16 %v709
    %v812 = vunpack.c.h.b16 %v709
    %v813 = vunpack.c.l.b16 %v710
    %v814 = vunpack.c.h.b16 %v710
    %v815 = vunpack.c.l.b16 %v711
    %v816 = vunpack.c.h.b16 %v711
    %v817 = vunpack.c.l.b16 %v712
    %v818 = vunpack.c.h.b16 %v712
    %v819 = vunpack.c.l.b16 %v713
    %v820 = vunpack.c.h.b16 %v713
    %v821 = vunpack.c.l.b16 %v714
    %v822 = vunpack.c.h.b16 %v714
    %v823 = vpack.c.b16 %v761, %v759
    %v824 = vpack.c.b16 %v762, %v760
    %v825 = vpack.c.b16 %v765, %v763
    %v826 = vpack.c.b16 %v766, %v764
    %v827 = vpack.c.b16 %v769, %v767
    %v828 = vpack.c.b16 %v770, %v768
    %v829 = vpack.c.b16 %v773, %v771
    %v830 = vpack.c.b16 %v774, %v772
    %v831 = vpack.c.b16 %v777, %v775
    %v832 = vpack.c.b16 %v778, %v776
    %v833 = vpack.c.b16 %v781, %v779
    %v834 = vpack.c.b16 %v782, %v780
    %v835 = vpack.c.b16 %v785, %v783
    %v836 = vpack.c.b16 %v786, %v784
    %v837 = vpack.c.b16 %v789, %v787
    %v838 = vpack.c.b16 %v790, %v788
    %v839 = vpack.c.b16 %v793, %v791
    %v840 = vpack.c.b16 %v794, %v792
    %v841 = vpack.c.b16 %v797, %v795
    %v842 = vpack.c.b16 %v798, %v796
    %v843 = vpack.c.b16 %v801, %v799
    %v844 = vpack.c.b16 %v802, %v800
    %v845 = vpack.c.b16 %v805, %v803
    %v846 = vpack.c.b16 %v806, %v804
    %v847 = vpack.c.b16 %v809, %v807
    %v848 = vpack.c.b16 %v810, %v808
    %v849 = vpack.c.b16 %v813, %v811
    %v850 = vpack.c.b16 %v814, %v812
    %v851 = vpack.c.b16 %v817, %v815
    %v852 = vpack.c.b16 %v818, %v816
    %v853 = vpack.c.b16 %v821, %v819
    %v854 = vpack.c.b16 %v822, %v820
    %887 = vmatprep.subr.bf16.mxu0 %v838
    %888 = vmatpush1.bf16.msra.mxu0 %v837
    %889 = vmatprep.subr.bf16.mxu0 %v836
    %890 = vmatpush1.bf16.msra.mxu0 %v835
    %891 = vmatprep.subr.bf16.mxu0 %v834
    %892 = vmatpush1.bf16.msra.mxu0 %v833
    %893 = vmatprep.subr.bf16.mxu0 %v832
    %894 = vmatpush1.bf16.msra.mxu0 %v831
    %895 = vmatprep.subr.bf16.mxu0 %v830
    %896 = vmatpush1.bf16.msra.mxu0 %v829
    %897 = vmatprep.subr.bf16.mxu0 %v828
    %898 = vmatpush1.bf16.msra.mxu0 %v827
    %899 = vmatprep.subr.bf16.mxu0 %v826
    %900 = vmatpush1.bf16.msra.mxu0 %v825
    %901 = vmatprep.subr.bf16.mxu0 %v824
    %902 = vmatpush1.bf16.msra.mxu0 %v823
    %903 = vmatprep.subr.bf16.mxu0 %v854
    %904 = vmatpush2.bf16.msra.mxu0 %v853
    %905 = vmatprep.subr.bf16.mxu0 %v852
    %906 = vmatpush2.bf16.msra.mxu0 %v851
    %907 = vmatprep.subr.bf16.mxu0 %v850
    %908 = vmatpush2.bf16.msra.mxu0 %v849
    %909 = vmatprep.subr.bf16.mxu0 %v848
    %910 = vmatpush2.bf16.msra.mxu0 %v847
    %911 = vmatprep.subr.bf16.mxu0 %v846
    %912 = vmatpush2.bf16.msra.mxu0 %v845
    %913 = vmatprep.subr.bf16.mxu0 %v844
    %914 = vmatpush2.bf16.msra.mxu0 %v843
    %915 = vmatprep.subr.bf16.mxu0 %v842
    %916 = vmatpush2.bf16.msra.mxu0 %v841
    %917 = vmatprep.subr.bf16.mxu0 %v840
    %918 = vmatpush2.bf16.msra.mxu0 %v839
    %919 = vmatprep.mubr.bf16.mxu0 %v416
    %920 = vmatmul.mubr.bf16.gmra.mxu0 %v415
    %v921 = vpop.f32.mrf.mxu0
    %v922 = vadd.f32 %v720, %v921
    %v923 = vpop.f32.mrf.mxu0
    %v924 = vadd.f32 %v724, %v923
    %v925 = vpop.f32.mrf.mxu0
    %v926 = vpop.f32.mrf.mxu0
    %927 = vdwg.mxu0
    %v928 = vmax.f32 %v922, 0.0
    %v929 = vmax.f32 %v924, 0.0
    %v930 = vld [vmem:[#allocation13] sm:$0x3]
    %v932 = vlaneseq
    %v933 = vshrl.u32 %v932, 7
    %v934 = vsub.s32 0, %v933
    %v935 = vrot.slane %v930, %v934
    %v936 = vlaneseq
    %v937 = vshrl.u32 %v936, 7
    %v938 = vsub.s32 1, %v937
    %v939 = vrot.slane %v930, %v938
    %v942 = vmul.f32 %v928, %v935
    %v943 = vmul.f32 %v929, %v939
    %v944 = vsel %vm179, %v942, 0.0
    %v945 = vsel %vm179, %v943, 0.0
    %v946 = vadd.f32 %v944, %v945
    %947 = vadd.xlane.f32.xlu0 %v946
    %v948 = vpop.xlane.xlu0 %947
    %v949 = vlaneseq
    %v950 = vand.u32 %v949, 127
    %vm951 = vcmp.eq.s32.totalorder %v950, 0
    %vm952 = vcmp.eq.s32.totalorder %v950, 1
    %v953 = vsel %vm952, %v948, 0.0
    %v954 = vsel %vm951, %v682, %v953
    %v955 = vld [vmem:[#allocation15] sm:$0x1]
    %v957 = vlaneseq
    %v958 = vshrl.u32 %v957, 7
    %v959 = vsub.s32 0, %v958
    %v960 = vrot.slane %v955, %v959
    %v962 = vadd.f32 %v954, %v960
    %963 = vst [vmem:[%s12] sm:$0x3] %v962
    // Predicated region
    $region86: #{sac_critic_forward.1} parent=1 // pred_check
      _
    $region87: #{sac_critic_forward.1} parent=1 // pred_check_branch
      %965 = sbr.rel (0) target = $region89
    $region88: #{sac_critic_forward.1} parent=1 // pred_region
      _
    $region89: #{sac_critic_forward.1} parent=1 // pred_fallthru
      _
    // Predicated region
    $region90: #{sac_critic_forward.1} parent=1 // pred_check
      _
    $region91: #{sac_critic_forward.1} parent=1 // pred_check_branch
      %967 = sbr.rel (0) target = $region93
    $region92: #{sac_critic_forward.1} parent=1 // pred_region
      _
    $region93: #{sac_critic_forward.1} parent=1 // pred_fallthru
      _
    %968 = vsyncpa [#allocation3], 1
    %969 = vsyncpa [#allocation5], 1
    %970 = vsyncpa [#allocation8], 1
    %971 = vsyncpa [#allocation11], 1
    %972 = vsyncpa [#allocation14], 1

</llo_original>
